<compile_context>
chip_gen: v7x
topology: tpu7x:2x2x1
jax: 0.10.0
libtpu: 0.0.40
codegen_flags: <defaults>
</compile_context>

<pallas_src>
import functools

import jax
import jax.numpy as jnp
from jax.experimental import pallas as pl
from jax.experimental.pallas import tpu as pltpu


def dqn_mlp_kernel(x_ref, w1_ref, b1_ref, w2_ref, b2_ref, w3_ref, b3_ref, o_ref,
                   *, matmul_dtype):
    """Fused 3-layer MLP on one batch tile: relu(relu(x@W1+b1)@W2+b2)@W3+b3."""

    def mxu_dot(a, b):
        # bf16 operands on the MXU, f32 accumulation.
        return jnp.dot(a.astype(matmul_dtype), b.astype(matmul_dtype),
                       preferred_element_type=jnp.float32)

    x = x_ref[...]

    # Layer 1: Linear + ReLU   (MXU matmul; bias/ReLU on the VPU in f32)
    h1 = mxu_dot(x, w1_ref[...])
    h1 = jnp.maximum(h1 + b1_ref[...], 0.0)      # b1 is [1, hidden] -> broadcast

    # Layer 2: Linear + ReLU
    h2 = mxu_dot(h1, w2_ref[...])
    h2 = jnp.maximum(h2 + b2_ref[...], 0.0)

    # Layer 3: Linear (no activation); W3/b3 are lane-padded to 128 outputs.
    out = mxu_dot(h2, w3_ref[...]) + b3_ref[...]

    # [TB, 128] store -> unmasked, lane-dense vst.
    o_ref[...] = out.astype(o_ref.dtype)


def dqn_forward(x, params, *, tb=128, matmul_dtype=jnp.bfloat16):
    """Batched DQN forward via one fused Pallas kernel.

    x: [B, obs_dim] float32.  Returns [B, obs_dim] float32.
    """
    w1, b1, w2, b2, w3, b3 = params
    B, obs_dim = x.shape
    hidden = w1.shape[1]
    out_dim = w3.shape[1]

    # --- Batch tiling: pad B up to a multiple of TB (multiple of 8 sublanes;
    # 128 rows feeds the MXU a full tile per push). Padding rows are zeros and
    # are sliced off the output.
    n_tiles = pl.cdiv(B, tb)
    B_pad = n_tiles * tb
    if B_pad != B:
        x = jnp.pad(x, ((0, B_pad - B), (0, 0)))

    # --- Lane-dense output: pad output features up to a multiple of 128 so the
    # kernel's store is a full-width (unmasked) vector store.
    F_pad = pl.cdiv(out_dim, 128) * 128
    if F_pad != out_dim:
        w3 = jnp.pad(w3, ((0, 0), (0, F_pad - out_dim)))
        b3 = jnp.pad(b3, ((0, 0), (0, F_pad - out_dim)))

    # Weights/biases: full-array blocks with a constant index_map -> fetched
    # once, VMEM-resident across the whole batch grid.
    def resident(a):
        return pl.BlockSpec(a.shape, lambda i: (0,) * a.ndim)

    out_padded = pl.pallas_call(
        functools.partial(dqn_mlp_kernel, matmul_dtype=matmul_dtype),
        out_shape=jax.ShapeDtypeStruct((B_pad, F_pad), x.dtype),
        grid_spec=pltpu.PrefetchScalarGridSpec(
            num_scalar_prefetch=0,
            grid=(n_tiles,),
            in_specs=[
                pl.BlockSpec((tb, obs_dim), lambda i: (i, 0)),   # x: batch-tiled
                resident(w1), resident(b1),
                resident(w2), resident(b2),
                resident(w3), resident(b3),
            ],
            out_specs=pl.BlockSpec((tb, F_pad), lambda i: (i, 0)),
        ),
        compiler_params=pltpu.CompilerParams(
            dimension_semantics=("parallel",),   # shard batch tiles across TCs (v7x)
        ),
    )(x, w1, b1, w2, b2, w3, b3)

    return out_padded[:B, :out_dim]


def init_params(key, obs_dim, hidden):
    """Deterministic init mimicking nn.Linear's U(-1/sqrt(fan_in), 1/sqrt(fan_in)).

    Weights are stored as [in_features, out_features] (transposed from
    PyTorch's [out, in]) so the kernel computes y = x @ W + b.
    """
    def linear(k, fan_in, fan_out):
        kw, kb = jax.random.split(k)
        bound = 1.0 / jnp.sqrt(fan_in)
        w = jax.random.uniform(kw, (fan_in, fan_out), jnp.float32, -bound, bound)
        b = jax.random.uniform(kb, (1, fan_out), jnp.float32, -bound, bound)
        return w, b

    k1, k2, k3 = jax.random.split(key, 3)
    w1, b1 = linear(k1, obs_dim, hidden)
    w2, b2 = linear(k2, hidden, hidden)
    w3, b3 = linear(k3, hidden, obs_dim)
    return (w1, b1, w2, b2, w3, b3)


def dqn_reference(x, params, matmul_dtype=None):
    """Pure-JAX reference. matmul_dtype mirrors the kernel's MXU input dtype."""
    w1, b1, w2, b2, w3, b3 = params

    def dot(a, b):
        if matmul_dtype is not None:
            a = a.astype(matmul_dtype)
            b = b.astype(matmul_dtype)
        return jnp.dot(a, b, preferred_element_type=jnp.float32)

    h = jnp.maximum(dot(x, w1) + b1, 0.0)
    h = jnp.maximum(dot(h, w2) + b2, 0.0)
    return dot(h, w3) + b3


if __name__ == "__main__":
    key = jax.random.PRNGKey(0)
    k_param, k_x = jax.random.split(key)

    batch = 200      # non-multiple of the 128-row tile: exercises batch padding
    obs_dim = 16     # observation_shape
    hidden = 32      # hidden_size (module default)

    params = init_params(k_param, obs_dim, hidden)
    x = jax.random.normal(k_x, (batch, obs_dim), jnp.float32)

    # 1) Exact-precision mode: f32 matmuls, tight check against f32 reference.
    out_f32 = jax.block_until_ready(
        dqn_forward(x, params, matmul_dtype=jnp.float32))
    ref_f32 = dqn_reference(x, params)
    assert out_f32.shape == (batch, obs_dim), out_f32.shape
    assert jnp.allclose(out_f32, ref_f32, atol=1e-5, rtol=1e-5), \
        f"f32 max abs err = {jnp.max(jnp.abs(out_f32 - ref_f32))}"

    # 2) Default perf mode: bf16 MXU inputs, f32 accumulation.
    out = jax.block_until_ready(dqn_forward(x, params))
    ref_bf16 = dqn_reference(x, params, matmul_dtype=jnp.bfloat16)
    assert out.shape == (batch, obs_dim), out.shape
    assert jnp.allclose(out, ref_bf16, atol=1e-2, rtol=1e-2), \
        f"bf16 max abs err = {jnp.max(jnp.abs(out - ref_bf16))}"

    print("KERNEL_OK")
</pallas_src>

<mosaic_0001>
module attributes {stable_mosaic.version = 11 : i64} {
  func.func @dqn_mlp_kernel(%arg0: i32, %arg1: memref<128x16xf32, #tpu.memory_space<vmem>>, %arg2: memref<16x32xf32, #tpu.memory_space<vmem>>, %arg3: memref<1x32xf32, #tpu.memory_space<vmem>>, %arg4: memref<32x32xf32, #tpu.memory_space<vmem>>, %arg5: memref<1x32xf32, #tpu.memory_space<vmem>>, %arg6: memref<32x128xf32, #tpu.memory_space<vmem>>, %arg7: memref<1x128xf32, #tpu.memory_space<vmem>>, %arg8: memref<128x128xf32, #tpu.memory_space<vmem>>) attributes {dimension_semantics = [#tpu.dimension_semantics<parallel>], iteration_bounds = array<i64: 2>, scalar_prefetch = 0 : i64, scratch_operands = 0 : i64, tpu.core_type = #tpu.core_type<tc>, window_params = [{transform_indices = @transform_0, window_bounds = array<i64: 128, 16>}, {pipeline_mode = #tpu.pipeline_mode<synchronous>, transform_indices = @transform_1, window_bounds = array<i64: 16, 32>}, {pipeline_mode = #tpu.pipeline_mode<synchronous>, transform_indices = @transform_2, window_bounds = array<i64: 1, 32>}, {pipeline_mode = #tpu.pipeline_mode<synchronous>, transform_indices = @transform_3, window_bounds = array<i64: 32, 32>}, {pipeline_mode = #tpu.pipeline_mode<synchronous>, transform_indices = @transform_4, window_bounds = array<i64: 1, 32>}, {pipeline_mode = #tpu.pipeline_mode<synchronous>, transform_indices = @transform_5, window_bounds = array<i64: 32, 128>}, {pipeline_mode = #tpu.pipeline_mode<synchronous>, transform_indices = @transform_6, window_bounds = array<i64: 1, 128>}, {transform_indices = @transform_7, window_bounds = array<i64: 128, 128>}]} {
    %c0 = arith.constant 0 : index
    %c0_0 = arith.constant 0 : index
    %0 = vector.load %arg1[%c0, %c0_0] : memref<128x16xf32, #tpu.memory_space<vmem>>, vector<128x16xf32>
    %c0_1 = arith.constant 0 : index
    %c0_2 = arith.constant 0 : index
    %1 = vector.load %arg2[%c0_1, %c0_2] : memref<16x32xf32, #tpu.memory_space<vmem>>, vector<16x32xf32>
    %cst = arith.constant dense<0.000000e+00> : vector<128x32xf32>
    %2 = tpu.matmul %0, %1, %cst {dimension_numbers = #tpu.dot_dimension_numbers<[1], [0], [0], [1], [0, 0, 1, 1], [], []>} : vector<128x16xf32>, vector<16x32xf32>, vector<128x32xf32> -> vector<128x32xf32>
    %c0_3 = arith.constant 0 : index
    %c0_4 = arith.constant 0 : index
    %3 = vector.load %arg3[%c0_3, %c0_4] : memref<1x32xf32, #tpu.memory_space<vmem>>, vector<1x32xf32>
    %4 = vector.broadcast %3 : vector<1x32xf32> to vector<128x32xf32>
    %5 = arith.addf %2, %4 : vector<128x32xf32>
    %cst_5 = arith.constant 0.000000e+00 : f32
    %6 = vector.broadcast %cst_5 : f32 to vector<128x32xf32>
    %7 = arith.maximumf %5, %6 : vector<128x32xf32>
    %c0_6 = arith.constant 0 : index
    %c0_7 = arith.constant 0 : index
    %8 = vector.load %arg4[%c0_6, %c0_7] : memref<32x32xf32, #tpu.memory_space<vmem>>, vector<32x32xf32>
    %cst_8 = arith.constant dense<0.000000e+00> : vector<128x32xf32>
    %9 = tpu.matmul %7, %8, %cst_8 {dimension_numbers = #tpu.dot_dimension_numbers<[1], [0], [0], [1], [0, 0, 1, 1], [], []>} : vector<128x32xf32>, vector<32x32xf32>, vector<128x32xf32> -> vector<128x32xf32>
    %c0_9 = arith.constant 0 : index
    %c0_10 = arith.constant 0 : index
    %10 = vector.load %arg5[%c0_9, %c0_10] : memref<1x32xf32, #tpu.memory_space<vmem>>, vector<1x32xf32>
    %11 = vector.broadcast %10 : vector<1x32xf32> to vector<128x32xf32>
    %12 = arith.addf %9, %11 : vector<128x32xf32>
    %cst_11 = arith.constant 0.000000e+00 : f32
    %13 = vector.broadcast %cst_11 : f32 to vector<128x32xf32>
    %14 = arith.maximumf %12, %13 : vector<128x32xf32>
    %c0_12 = arith.constant 0 : index
    %c0_13 = arith.constant 0 : index
    %15 = vector.load %arg6[%c0_12, %c0_13] : memref<32x128xf32, #tpu.memory_space<vmem>>, vector<32x128xf32>
    %cst_14 = arith.constant dense<0.000000e+00> : vector<128x128xf32>
    %16 = tpu.matmul %14, %15, %cst_14 {dimension_numbers = #tpu.dot_dimension_numbers<[1], [0], [0], [1], [0, 0, 1, 1], [], []>} : vector<128x32xf32>, vector<32x128xf32>, vector<128x128xf32> -> vector<128x128xf32>
    %c0_15 = arith.constant 0 : index
    %c0_16 = arith.constant 0 : index
    %17 = vector.load %arg7[%c0_15, %c0_16] : memref<1x128xf32, #tpu.memory_space<vmem>>, vector<1x128xf32>
    %18 = vector.broadcast %17 : vector<1x128xf32> to vector<128x128xf32>
    %19 = arith.addf %16, %18 : vector<128x128xf32>
    %c0_17 = arith.constant 0 : index
    %c0_18 = arith.constant 0 : index
    %20 = vector.load %arg8[%c0_17, %c0_18] : memref<128x128xf32, #tpu.memory_space<vmem>>, vector<128x128xf32>
    tpu.vector_store %arg8[%c0_17, %c0_18], %19 {strides = array<i32>} : memref<128x128xf32, #tpu.memory_space<vmem>>, vector<128x128xf32>,
    return
  }
  func.func @transform_0(%arg0: i32) -> (i32, i32) {
    %c0_i32 = arith.constant 0 : i32
    %c0_i32_0 = arith.constant 0 : i32
    return %arg0, %c0_i32 : i32, i32
  }
  func.func @transform_1(%arg0: i32) -> (i32, i32) {
    %c0_i32 = arith.constant 0 : i32
    %c0_i32_0 = arith.constant 0 : i32
    %c0_i32_1 = arith.constant 0 : i32
    return %c0_i32, %c0_i32_0 : i32, i32
  }
  func.func @transform_2(%arg0: i32) -> (i32, i32) {
    %c0_i32 = arith.constant 0 : i32
    %c0_i32_0 = arith.constant 0 : i32
    %c0_i32_1 = arith.constant 0 : i32
    return %c0_i32, %c0_i32_0 : i32, i32
  }
  func.func @transform_3(%arg0: i32) -> (i32, i32) {
    %c0_i32 = arith.constant 0 : i32
    %c0_i32_0 = arith.constant 0 : i32
    %c0_i32_1 = arith.constant 0 : i32
    return %c0_i32, %c0_i32_0 : i32, i32
  }
  func.func @transform_4(%arg0: i32) -> (i32, i32) {
    %c0_i32 = arith.constant 0 : i32
    %c0_i32_0 = arith.constant 0 : i32
    %c0_i32_1 = arith.constant 0 : i32
    return %c0_i32, %c0_i32_0 : i32, i32
  }
  func.func @transform_5(%arg0: i32) -> (i32, i32) {
    %c0_i32 = arith.constant 0 : i32
    %c0_i32_0 = arith.constant 0 : i32
    %c0_i32_1 = arith.constant 0 : i32
    return %c0_i32, %c0_i32_0 : i32, i32
  }
  func.func @transform_6(%arg0: i32) -> (i32, i32) {
    %c0_i32 = arith.constant 0 : i32
    %c0_i32_0 = arith.constant 0 : i32
    %c0_i32_1 = arith.constant 0 : i32
    return %c0_i32, %c0_i32_0 : i32, i32
  }
  func.func @transform_7(%arg0: i32) -> (i32, i32) {
    %c0_i32 = arith.constant 0 : i32
    %c0_i32_0 = arith.constant 0 : i32
    return %arg0, %c0_i32 : i32, i32
  }
}

</mosaic_0001>

<llo_original>
// kernel: tpu_custom_call.1
$region0: #{tpu_custom_call.1}
  #allocation0 [shape = 'u32[]', space=smem, size = 0x4, offset = 0x4, fixed_abs, tag = 'smem constant byte address 0x4 - core index']
  #allocation1 [shape = 'u32[144,128]{1,0:T(1,128)}', space=vmem, size = 0x12000, scoped, tag = 'internal scratch']
  %s0 = inlined_call_operand.vmem [shape: f32[256,16], index: 0, kind: input, shape index: {}]
  %s1 = inlined_call_operand.vmem [shape: f32[16,32], index: 1, kind: input, shape index: {}]
  %s2 = inlined_call_operand.vmem [shape: f32[1,32], index: 2, kind: input, shape index: {}]
  %s3 = inlined_call_operand.vmem [shape: f32[32,32], index: 3, kind: input, shape index: {}]
  %s4 = inlined_call_operand.vmem [shape: f32[1,32], index: 4, kind: input, shape index: {}]
  %s5 = inlined_call_operand.vmem [shape: f32[32,128], index: 5, kind: input, shape index: {}]
  %s6 = inlined_call_operand.vmem [shape: f32[1,128], index: 6, kind: input, shape index: {}]
  %s7 = inlined_call_operand.hbm [shape: f32[256,128], index: 7, kind: output, shape index: {}]
  %s8 = sld [smem:[#allocation0]]
  $region61: #{tpu_custom_call.1} parent=0
    _
  %s10 = ssub.s32 1, %s8
  %s11 = scalar_select 0, %s10, %s8
  $region1: #{tpu_custom_call.1} parent=0
    #allocation2 [shape = 'u8[131072]{0}', space=vmem, size = 0x20000, scoped, tag = 'output window, operand 0']
    #allocation3 [shape = 's32[2]{0}', space=sflag, size = 0x8, scoped, tag = 'scoped memory for tpu_custom_call.1']
    %12 = vsyncpa [#allocation3], 0
    %s13 = scalar_lea.sflag [#allocation3], 1
    %14 = vsyncpa %s13, 0
    loop: start=0, step=1, limit=4
    $region2: #{tpu_custom_call.1} parent=1 // loop_pre_header
      _
    $region3: #{tpu_custom_call.1} parent=1 // loop_header
      %s16 = sphi 0, %s20
      %p17 = scmp.ge.s32.totalorder %s16, 4
      %s26 = sphi 0, %s28
      %s29 = sphi 0, %s26
      %s30 = sphi 0, %s29
      %s46 = sphi 0, %s30
      %s50 = sphi 0, %s50
      %s52 = sphi 0, %s50
      %s53 = sphi 0, %s52
      %s67 = sphi 0, %s53
      %s71 = sphi 0, %s71
      %s73 = sphi 0, %s71
      %s74 = sphi 0, %s73
      %s88 = sphi 0, %s74
      %s92 = sphi 0, %s92
      %s94 = sphi 0, %s92
      %s95 = sphi 0, %s94
      %s109 = sphi 0, %s95
      %s113 = sphi 0, %s113
      %s115 = sphi 0, %s113
      %s116 = sphi 0, %s115
      %s130 = sphi 0, %s116
      %s134 = sphi 0, %s134
      %s136 = sphi 0, %s134
      %s137 = sphi 0, %s136
      %s151 = sphi 0, %s137
      %s155 = sphi 0, %s155
      %s157 = sphi 0, %s155
      %s158 = sphi 0, %s157
      %s172 = sphi 0, %s158
      %s178 = sphi 0, %s180
      %s181 = sphi 0, %s178
      %s182 = sphi 0, %s181
      %s198 = sphi 0, %s182
    $region4: #{tpu_custom_call.1} parent=1 // loop_header_branch
      %19 = sbr.rel (%p17) target = $region8
    $region5: #{tpu_custom_call.1} parent=1 // loop_body
      %s21 = ssub.s32 %s16, 1
      %s22 = ssub.s32 %s16, 2
      %s23 = sadd.s32 %s16, 1
      %s24 = ssub.s32 %s16, %s23
      %p25 = scmp.eq.s32.totalorder %s24, 0
      %s27 = sadd.s32 %s26, 1
      %s28 = scalar_select %p25, %s26, %s27
      %p31 = pneg %p25
      %p32 = scmp.eq.s32.totalorder %s16, 1
      %p33 = por %p31, %p32
      %p34 = scmp.ne.s32.totalorder %s26, %s29
      %p35 = scmp.eq.s32.totalorder %s16, 0
      %p36 = por %p34, %p35
      %p37 = scmp.ne.s32.totalorder %s26, %s29
      %p38 = scmp.eq.s32.totalorder %s21, 1
      %p39 = por %p37, %p38
      %p40 = scmp.ne.s32.totalorder %s29, %s30
      %p41 = scmp.eq.s32.totalorder %s21, 0
      %p42 = por %p40, %p41
      %p43 = scmp.ne.s32.totalorder %s29, %s30
      %p44 = scmp.eq.s32.totalorder %s22, 1
      %p45 = por %p43, %p44
      %p47 = scmp.ne.s32.totalorder %s30, %s46
      %p48 = scmp.eq.s32.totalorder %s22, 0
      %p49 = por %p47, %p48
      %s51 = sadd.s32 %s50, 1
      %p54 = scmp.eq.s32.totalorder %s16, 1
      %p55 = scmp.ne.s32.totalorder %s50, %s52
      %p56 = scmp.eq.s32.totalorder %s16, 0
      %p57 = por %p55, %p56
      %p58 = scmp.ne.s32.totalorder %s50, %s52
      %p59 = scmp.eq.s32.totalorder %s21, 1
      %p60 = por %p58, %p59
      %p61 = scmp.ne.s32.totalorder %s52, %s53
      %p62 = scmp.eq.s32.totalorder %s21, 0
      %p63 = por %p61, %p62
      %p64 = scmp.ne.s32.totalorder %s52, %s53
      %p65 = scmp.eq.s32.totalorder %s22, 1
      %p66 = por %p64, %p65
      %p68 = scmp.ne.s32.totalorder %s53, %s67
      %p69 = scmp.eq.s32.totalorder %s22, 0
      %p70 = por %p68, %p69
      %s72 = sadd.s32 %s71, 1
      %p75 = scmp.eq.s32.totalorder %s16, 1
      %p76 = scmp.ne.s32.totalorder %s71, %s73
      %p77 = scmp.eq.s32.totalorder %s16, 0
      %p78 = por %p76, %p77
      %p79 = scmp.ne.s32.totalorder %s71, %s73
      %p80 = scmp.eq.s32.totalorder %s21, 1
      %p81 = por %p79, %p80
      %p82 = scmp.ne.s32.totalorder %s73, %s74
      %p83 = scmp.eq.s32.totalorder %s21, 0
      %p84 = por %p82, %p83
      %p85 = scmp.ne.s32.totalorder %s73, %s74
      %p86 = scmp.eq.s32.totalorder %s22, 1
      %p87 = por %p85, %p86
      %p89 = scmp.ne.s32.totalorder %s74, %s88
      %p90 = scmp.eq.s32.totalorder %s22, 0
      %p91 = por %p89, %p90
      %s93 = sadd.s32 %s92, 1
      %p96 = scmp.eq.s32.totalorder %s16, 1
      %p97 = scmp.ne.s32.totalorder %s92, %s94
      %p98 = scmp.eq.s32.totalorder %s16, 0
      %p99 = por %p97, %p98
      %p100 = scmp.ne.s32.totalorder %s92, %s94
      %p101 = scmp.eq.s32.totalorder %s21, 1
      %p102 = por %p100, %p101
      %p103 = scmp.ne.s32.totalorder %s94, %s95
      %p104 = scmp.eq.s32.totalorder %s21, 0
      %p105 = por %p103, %p104
      %p106 = scmp.ne.s32.totalorder %s94, %s95
      %p107 = scmp.eq.s32.totalorder %s22, 1
      %p108 = por %p106, %p107
      %p110 = scmp.ne.s32.totalorder %s95, %s109
      %p111 = scmp.eq.s32.totalorder %s22, 0
      %p112 = por %p110, %p111
      %s114 = sadd.s32 %s113, 1
      %p117 = scmp.eq.s32.totalorder %s16, 1
      %p118 = scmp.ne.s32.totalorder %s113, %s115
      %p119 = scmp.eq.s32.totalorder %s16, 0
      %p120 = por %p118, %p119
      %p121 = scmp.ne.s32.totalorder %s113, %s115
      %p122 = scmp.eq.s32.totalorder %s21, 1
      %p123 = por %p121, %p122
      %p124 = scmp.ne.s32.totalorder %s115, %s116
      %p125 = scmp.eq.s32.totalorder %s21, 0
      %p126 = por %p124, %p125
      %p127 = scmp.ne.s32.totalorder %s115, %s116
      %p128 = scmp.eq.s32.totalorder %s22, 1
      %p129 = por %p127, %p128
      %p131 = scmp.ne.s32.totalorder %s116, %s130
      %p132 = scmp.eq.s32.totalorder %s22, 0
      %p133 = por %p131, %p132
      %s135 = sadd.s32 %s134, 1
      %p138 = scmp.eq.s32.totalorder %s16, 1
      %p139 = scmp.ne.s32.totalorder %s134, %s136
      %p140 = scmp.eq.s32.totalorder %s16, 0
      %p141 = por %p139, %p140
      %p142 = scmp.ne.s32.totalorder %s134, %s136
      %p143 = scmp.eq.s32.totalorder %s21, 1
      %p144 = por %p142, %p143
      %p145 = scmp.ne.s32.totalorder %s136, %s137
      %p146 = scmp.eq.s32.totalorder %s21, 0
      %p147 = por %p145, %p146
      %p148 = scmp.ne.s32.totalorder %s136, %s137
      %p149 = scmp.eq.s32.totalorder %s22, 1
      %p150 = por %p148, %p149
      %p152 = scmp.ne.s32.totalorder %s137, %s151
      %p153 = scmp.eq.s32.totalorder %s22, 0
      %p154 = por %p152, %p153
      %s156 = sadd.s32 %s155, 1
      %p159 = scmp.eq.s32.totalorder %s16, 1
      %p160 = scmp.ne.s32.totalorder %s155, %s157
      %p161 = scmp.eq.s32.totalorder %s16, 0
      %p162 = por %p160, %p161
      %p163 = scmp.ne.s32.totalorder %s155, %s157
      %p164 = scmp.eq.s32.totalorder %s21, 1
      %p165 = por %p163, %p164
      %p166 = scmp.ne.s32.totalorder %s157, %s158
      %p167 = scmp.eq.s32.totalorder %s21, 0
      %p168 = por %p166, %p167
      %p169 = scmp.ne.s32.totalorder %s157, %s158
      %p170 = scmp.eq.s32.totalorder %s22, 1
      %p171 = por %p169, %p170
      %p173 = scmp.ne.s32.totalorder %s158, %s172
      %p174 = scmp.eq.s32.totalorder %s22, 0
      %p175 = por %p173, %p174
      %s176 = ssub.s32 %s16, %s23
      %p177 = scmp.eq.s32.totalorder %s176, 0
      %s179 = sadd.s32 %s178, 1
      %s180 = scalar_select %p177, %s178, %s179
      %p183 = pneg %p177
      %p184 = scmp.eq.s32.totalorder %s16, 1
      %p185 = por %p183, %p184
      %p186 = scmp.ne.s32.totalorder %s178, %s181
      %p187 = scmp.eq.s32.totalorder %s16, 0
      %p188 = por %p186, %p187
      %p189 = scmp.ne.s32.totalorder %s178, %s181
      %p190 = scmp.eq.s32.totalorder %s21, 1
      %p191 = por %p189, %p190
      %p192 = scmp.ne.s32.totalorder %s181, %s182
      %p193 = scmp.eq.s32.totalorder %s21, 0
      %p194 = por %p192, %p193
      %p195 = scmp.ne.s32.totalorder %s181, %s182
      %p196 = scmp.eq.s32.totalorder %s22, 1
      %p197 = por %p195, %p196
      %p199 = scmp.ne.s32.totalorder %s182, %s198
      %p200 = scmp.eq.s32.totalorder %s22, 0
      %p201 = por %p199, %p200
      %p202 = scmp.le.s32.totalorder 1, %s16
      %p203 = scmp.lt.s32.totalorder %s16, 3
      %p204 = pnand %p202, %p203
      %p205 = pneg %p204
      // Predicated region
      $region9: #{tpu_custom_call.1} parent=5 // pred_check
        _
      $region10: #{tpu_custom_call.1} parent=5 // pred_check_branch
        %207 = sbr.rel (%p204) target = $region12
      $region11: #{tpu_custom_call.1} parent=5 // pred_region
        %s208 = ssub.s32 %s16, 1
        // Predicated region
        $region13: #{tpu_custom_call.1} parent=11 // pred_check
          %p209 = pneg %p63
        $region14: #{tpu_custom_call.1} parent=11 // pred_check_branch
          %211 = sbr.rel (%p209) target = $region16
        $region15: #{tpu_custom_call.1} parent=11 // pred_region
          _
        $region16: #{tpu_custom_call.1} parent=11 // pred_fallthru
          _
        // Predicated region
        $region17: #{tpu_custom_call.1} parent=11 // pred_check
          %p212 = pneg %p84
        $region18: #{tpu_custom_call.1} parent=11 // pred_check_branch
          %214 = sbr.rel (%p212) target = $region20
        $region19: #{tpu_custom_call.1} parent=11 // pred_region
          _
        $region20: #{tpu_custom_call.1} parent=11 // pred_fallthru
          _
        // Predicated region
        $region21: #{tpu_custom_call.1} parent=11 // pred_check
          %p215 = pneg %p105
        $region22: #{tpu_custom_call.1} parent=11 // pred_check_branch
          %217 = sbr.rel (%p215) target = $region24
        $region23: #{tpu_custom_call.1} parent=11 // pred_region
          _
        $region24: #{tpu_custom_call.1} parent=11 // pred_fallthru
          _
        // Predicated region
        $region25: #{tpu_custom_call.1} parent=11 // pred_check
          %p218 = pneg %p126
        $region26: #{tpu_custom_call.1} parent=11 // pred_check_branch
          %220 = sbr.rel (%p218) target = $region28
        $region27: #{tpu_custom_call.1} parent=11 // pred_region
          _
        $region28: #{tpu_custom_call.1} parent=11 // pred_fallthru
          _
        // Predicated region
        $region29: #{tpu_custom_call.1} parent=11 // pred_check
          %p221 = pneg %p147
        $region30: #{tpu_custom_call.1} parent=11 // pred_check_branch
          %223 = sbr.rel (%p221) target = $region32
        $region31: #{tpu_custom_call.1} parent=11 // pred_region
          _
        $region32: #{tpu_custom_call.1} parent=11 // pred_fallthru
          _
        // Predicated region
        $region33: #{tpu_custom_call.1} parent=11 // pred_check
          %p224 = pneg %p168
        $region34: #{tpu_custom_call.1} parent=11 // pred_check_branch
          %226 = sbr.rel (%p224) target = $region36
        $region35: #{tpu_custom_call.1} parent=11 // pred_region
          _
        $region36: #{tpu_custom_call.1} parent=11 // pred_fallthru
          _
      $region12: #{tpu_custom_call.1} parent=5 // pred_fallthru
        _
      %p227 = scmp.lt.s32.totalorder %s16, 2
      // Predicated region
      $region37: #{tpu_custom_call.1} parent=5 // pred_check
        %p228 = pneg %p227
      $region38: #{tpu_custom_call.1} parent=5 // pred_check_branch
        %230 = sbr.rel (%p228) target = $region40
      $region39: #{tpu_custom_call.1} parent=5 // pred_region
        // Predicated region
        $region41: #{tpu_custom_call.1} parent=39 // pred_check
          %p231 = pneg %p36
        $region42: #{tpu_custom_call.1} parent=39 // pred_check_branch
          %233 = sbr.rel (%p231) target = $region44
        $region43: #{tpu_custom_call.1} parent=39 // pred_region
          %s234 = smul.u32 16, %s16
          %p235 = scmp.lt.s32.totalorder %s234, 31
          %s236 = scalar_select %p235, %s234, 31
          %s237 = smul.addr %s236, 8
          %s238 = scalar_lea.vmem %s0, %s237
          %s239 = smul.u32 16, %s16
        $region44: #{tpu_custom_call.1} parent=39 // pred_fallthru
          _
      $region40: #{tpu_custom_call.1} parent=5 // pred_fallthru
        _
      %p240 = scmp.le.s32.totalorder 1, %s16
      %p241 = scmp.lt.s32.totalorder %s16, 3
      %p242 = pnand %p240, %p241
      %p243 = pneg %p242
      // Predicated region
      $region45: #{tpu_custom_call.1} parent=5 // pred_check
        _
      $region46: #{tpu_custom_call.1} parent=5 // pred_check_branch
        %245 = sbr.rel (%p242) target = $region48
      $region47: #{tpu_custom_call.1} parent=5 // pred_region
        %s246 = ssub.s32 %s16, 1
        %s247 = smul.u32 16, %s21
        %p248 = scmp.lt.s32.totalorder %s247, 31
        %s249 = scalar_select %p248, %s247, 31
        %s250 = smul.addr %s249, 8
        %s251 = scalar_lea.vmem %s0, %s250
        %p252 = pneg %p42
        %p253 = pneg %p39
        %p254 = pneg %p63
        %p255 = pneg %p60
        %p256 = pneg %p84
        %p257 = pneg %p81
        %p258 = pneg %p105
        %p259 = pneg %p102
        %p260 = pneg %p126
        %p261 = pneg %p123
        %p262 = pneg %p147
        %p263 = pneg %p144
        %p264 = pneg %p168
        %p265 = pneg %p165
        %p266 = pneg %p194
        %p267 = pneg %p191
        %s268 = sand.u32 %s181, 1
        %s269 = scalar_lea.sflag [#allocation3], %s268
        %s270 = sand.u32 %s181, 1
        %s271 = smul.addr %s270, 128
        %s272 = scalar_lea.vmem [#allocation2], %s271
        %s273 = smul.u32 16, %s21
        %p274 = scmp.lt.s32.totalorder %s273, 31
        %s275 = scalar_select %p274, %s273, 31
        %s276 = smul.addr %s275, 8
        %s277 = scalar_lea.vmem %s0, %s276
        %s278 = smul.u32 16, %s21
        %s279 = smul.u32 16, %s21
        %v280 = vld [vmem:[%s277] sm:$0xff]
        %v281 = vld [vmem:[%s277 + $0x8] sm:$0xff]
        %v282 = vld [vmem:[%s277 + $0x10] sm:$0xff]
        %v283 = vld [vmem:[%s277 + $0x18] sm:$0xff]
        %v284 = vld [vmem:[%s277 + $0x20] sm:$0xff]
        %v285 = vld [vmem:[%s277 + $0x28] sm:$0xff]
        %v286 = vld [vmem:[%s277 + $0x30] sm:$0xff]
        %v287 = vld [vmem:[%s277 + $0x38] sm:$0xff]
        %v288 = vld [vmem:[%s277 + $0x40] sm:$0xff]
        %v289 = vld [vmem:[%s277 + $0x48] sm:$0xff]
        %v290 = vld [vmem:[%s277 + $0x50] sm:$0xff]
        %v291 = vld [vmem:[%s277 + $0x58] sm:$0xff]
        %v292 = vld [vmem:[%s277 + $0x60] sm:$0xff]
        %v293 = vld [vmem:[%s277 + $0x68] sm:$0xff]
        %v294 = vld [vmem:[%s277 + $0x70] sm:$0xff]
        %v295 = vld [vmem:[%s277 + $0x78] sm:$0xff]
        %v296 = vld [vmem:[%s1] sm:$0xff]
        %v297 = vld [vmem:[%s1 + $0x8] sm:$0xff]
        %v298 = vld [vmem:[%s2] sm:$0x1]
        %v300 = vlaneseq
        %v301 = vshrl.u32 %v300, 7
        %v302 = vsub.s32 0, %v301
        %v303 = vrot.slane %v298, %v302
        %vm305 = vcmask 130048
        %v307 = vsel %vm305, %v280, 0
        %v310 = vsel %vm305, %v281, 0
        %v313 = vsel %vm305, %v282, 0
        %v316 = vsel %vm305, %v283, 0
        %v319 = vsel %vm305, %v284, 0
        %v322 = vsel %vm305, %v285, 0
        %v325 = vsel %vm305, %v286, 0
        %v328 = vsel %vm305, %v287, 0
        %v331 = vsel %vm305, %v288, 0
        %v334 = vsel %vm305, %v289, 0
        %v337 = vsel %vm305, %v290, 0
        %v340 = vsel %vm305, %v291, 0
        %v343 = vsel %vm305, %v292, 0
        %v346 = vsel %vm305, %v293, 0
        %v349 = vsel %vm305, %v294, 0
        %v352 = vsel %vm305, %v295, 0
        %354 = vmatprep.subr.mxu0 0.0
        %355 = vmatpush1.msra.mxu0 %v296
        %356 = vmatprep.subr.mxu0 0.0
        %357 = vmatpush1.msra.mxu0 %v297
        %358 = vmatprep.subr.mxu0 0.0
        %359 = vmatpush1.msra.mxu0 0.0
        %360 = vmatprep.subr.mxu0 0.0
        %361 = vmatpush1.msra.mxu0 0.0
        %362 = vmatprep.subr.mxu0 0.0
        %363 = vmatpush1.msra.mxu0 0.0
        %364 = vmatprep.subr.mxu0 0.0
        %365 = vmatpush1.msra.mxu0 0.0
        %366 = vmatprep.subr.mxu0 0.0
        %367 = vmatpush1.msra.mxu0 0.0
        %368 = vmatprep.subr.mxu0 0.0
        %369 = vmatpush1.msra.mxu0 0.0
        %370 = vmatprep.subr.mxu0 0.0
        %371 = vmatpush1.msra.mxu0 0.0
        %372 = vmatprep.subr.mxu0 0.0
        %373 = vmatpush1.msra.mxu0 0.0
        %374 = vmatprep.subr.mxu0 0.0
        %375 = vmatpush1.msra.mxu0 0.0
        %376 = vmatprep.subr.mxu0 0.0
        %377 = vmatpush1.msra.mxu0 0.0
        %378 = vmatprep.subr.mxu0 0.0
        %379 = vmatpush1.msra.mxu0 0.0
        %380 = vmatprep.subr.mxu0 0.0
        %381 = vmatpush1.msra.mxu0 0.0
        %382 = vmatprep.subr.mxu0 0.0
        %383 = vmatpush1.msra.mxu0 0.0
        %384 = vmatprep.subr.mxu0 0.0
        %385 = vmatpush1.msra.mxu0 0.0
        %386 = vmatprep.subr.mxu0 0.0
        %387 = vmatpush1.msra.mxu0 0.0
        %388 = vmatprep.subr.mxu0 0.0
        %389 = vmatpush1.msra.mxu0 0.0
        %390 = vmatprep.subr.mxu0 0.0
        %391 = vmatpush1.msra.mxu0 0.0
        %392 = vmatprep.subr.mxu0 0.0
        %393 = vmatpush1.msra.mxu0 0.0
        %394 = vmatprep.subr.mxu0 0.0
        %395 = vmatpush1.msra.mxu0 0.0
        %396 = vmatprep.subr.mxu0 0.0
        %397 = vmatpush1.msra.mxu0 0.0
        %398 = vmatprep.subr.mxu0 0.0
        %399 = vmatpush1.msra.mxu0 0.0
        %400 = vmatprep.subr.mxu0 0.0
        %401 = vmatpush1.msra.mxu0 0.0
        %402 = vmatprep.subr.mxu0 0.0
        %403 = vmatpush1.msra.mxu0 0.0
        %404 = vmatprep.subr.mxu0 0.0
        %405 = vmatpush1.msra.mxu0 0.0
        %406 = vmatprep.subr.mxu0 0.0
        %407 = vmatpush1.msra.mxu0 0.0
        %408 = vmatprep.subr.mxu0 0.0
        %409 = vmatpush1.msra.mxu0 0.0
        %410 = vmatprep.subr.mxu0 0.0
        %411 = vmatpush1.msra.mxu0 0.0
        %412 = vmatprep.subr.mxu0 0.0
        %413 = vmatpush1.msra.mxu0 0.0
        %414 = vmatprep.subr.mxu0 0.0
        %415 = vmatpush1.msra.mxu0 0.0
        %416 = vmatprep.subr.mxu0 0.0
        %417 = vmatpush1.msra.mxu0 0.0
        %418 = vmatprep.mubr.f32.mxu0 0.0
        %419 = vmatmul.mubr.f32.gmra.mrb[0].mxu0 %v307
        %v420 = vpop.f32.mrb[0].mxu0
        %v421 = vadd.f32 %v303, %v420
        %v422 = vpop.f32.mrb[0].mxu0
        %423 = vmatprep.mubr.f32.mxu0 0.0
        %424 = vmatmul.mubr.f32.gmra.mrb[0].mxu0 %v310
        %v425 = vpop.f32.mrb[0].mxu0
        %v426 = vadd.f32 %v303, %v425
        %v427 = vpop.f32.mrb[0].mxu0
        %428 = vmatprep.mubr.f32.mxu0 0.0
        %429 = vmatmul.mubr.f32.gmra.mrb[0].mxu0 %v313
        %v430 = vpop.f32.mrb[0].mxu0
        %v431 = vadd.f32 %v303, %v430
        %v432 = vpop.f32.mrb[0].mxu0
        %433 = vmatprep.mubr.f32.mxu0 0.0
        %434 = vmatmul.mubr.f32.gmra.mrb[0].mxu0 %v316
        %v435 = vpop.f32.mrb[0].mxu0
        %v436 = vadd.f32 %v303, %v435
        %v437 = vpop.f32.mrb[0].mxu0
        %438 = vmatprep.mubr.f32.mxu0 0.0
        %439 = vmatmul.mubr.f32.gmra.mrb[0].mxu0 %v319
        %v440 = vpop.f32.mrb[0].mxu0
        %v441 = vadd.f32 %v303, %v440
        %v442 = vpop.f32.mrb[0].mxu0
        %443 = vmatprep.mubr.f32.mxu0 0.0
        %444 = vmatmul.mubr.f32.gmra.mrb[0].mxu0 %v322
        %v445 = vpop.f32.mrb[0].mxu0
        %v446 = vadd.f32 %v303, %v445
        %v447 = vpop.f32.mrb[0].mxu0
        %448 = vmatprep.mubr.f32.mxu0 0.0
        %449 = vmatmul.mubr.f32.gmra.mrb[0].mxu0 %v325
        %v450 = vpop.f32.mrb[0].mxu0
        %v451 = vadd.f32 %v303, %v450
        %v452 = vpop.f32.mrb[0].mxu0
        %453 = vmatprep.mubr.f32.mxu0 0.0
        %454 = vmatmul.mubr.f32.gmra.mrb[0].mxu0 %v328
        %v455 = vpop.f32.mrb[0].mxu0
        %v456 = vadd.f32 %v303, %v455
        %v457 = vpop.f32.mrb[0].mxu0
        %458 = vmatprep.mubr.f32.mxu0 0.0
        %459 = vmatmul.mubr.f32.gmra.mrb[0].mxu0 %v331
        %v460 = vpop.f32.mrb[0].mxu0
        %v461 = vadd.f32 %v303, %v460
        %v462 = vpop.f32.mrb[0].mxu0
        %463 = vmatprep.mubr.f32.mxu0 0.0
        %464 = vmatmul.mubr.f32.gmra.mrb[0].mxu0 %v334
        %v465 = vpop.f32.mrb[0].mxu0
        %v466 = vadd.f32 %v303, %v465
        %v467 = vpop.f32.mrb[0].mxu0
        %468 = vmatprep.mubr.f32.mxu0 0.0
        %469 = vmatmul.mubr.f32.gmra.mrb[0].mxu0 %v337
        %v470 = vpop.f32.mrb[0].mxu0
        %v471 = vadd.f32 %v303, %v470
        %v472 = vpop.f32.mrb[0].mxu0
        %473 = vmatprep.mubr.f32.mxu0 0.0
        %474 = vmatmul.mubr.f32.gmra.mrb[0].mxu0 %v340
        %v475 = vpop.f32.mrb[0].mxu0
        %v476 = vadd.f32 %v303, %v475
        %v477 = vpop.f32.mrb[0].mxu0
        %478 = vmatprep.mubr.f32.mxu0 0.0
        %479 = vmatmul.mubr.f32.gmra.mrb[0].mxu0 %v343
        %v480 = vpop.f32.mrb[0].mxu0
        %v481 = vadd.f32 %v303, %v480
        %v482 = vpop.f32.mrb[0].mxu0
        %483 = vmatprep.mubr.f32.mxu0 0.0
        %484 = vmatmul.mubr.f32.gmra.mrb[0].mxu0 %v346
        %v485 = vpop.f32.mrb[0].mxu0
        %v486 = vadd.f32 %v303, %v485
        %v487 = vpop.f32.mrb[0].mxu0
        %488 = vmatprep.mubr.f32.mxu0 0.0
        %489 = vmatmul.mubr.f32.gmra.mrb[0].mxu0 %v349
        %v490 = vpop.f32.mrb[0].mxu0
        %v491 = vadd.f32 %v303, %v490
        %v492 = vpop.f32.mrb[0].mxu0
        %493 = vmatprep.mubr.f32.mxu0 0.0
        %494 = vmatmul.mubr.f32.gmra.mrb[0].mxu0 %v352
        %v495 = vpop.f32.mrb[0].mxu0
        %v496 = vadd.f32 %v303, %v495
        %v497 = vpop.f32.mrb[0].mxu0
        %498 = vdwg.mxu0
        %v499 = vmax.f32 %v421, 0.0
        %v500 = vmax.f32 %v426, 0.0
        %v501 = vmax.f32 %v431, 0.0
        %v502 = vmax.f32 %v436, 0.0
        %v503 = vmax.f32 %v441, 0.0
        %v504 = vmax.f32 %v446, 0.0
        %v505 = vmax.f32 %v451, 0.0
        %v506 = vmax.f32 %v456, 0.0
        %v507 = vmax.f32 %v461, 0.0
        %v508 = vmax.f32 %v466, 0.0
        %v509 = vmax.f32 %v471, 0.0
        %v510 = vmax.f32 %v476, 0.0
        %v511 = vmax.f32 %v481, 0.0
        %v512 = vmax.f32 %v486, 0.0
        %v513 = vmax.f32 %v491, 0.0
        %v514 = vmax.f32 %v496, 0.0
        %v515 = vld [vmem:[%s3] sm:$0xff]
        %v516 = vld [vmem:[%s3 + $0x8] sm:$0xff]
        %v517 = vld [vmem:[%s3 + $0x10] sm:$0xff]
        %v518 = vld [vmem:[%s3 + $0x18] sm:$0xff]
        %v519 = vld [vmem:[%s4] sm:$0x1]
        %v521 = vlaneseq
        %v522 = vshrl.u32 %v521, 7
        %v523 = vsub.s32 0, %v522
        %v524 = vrot.slane %v519, %v523
        %vm526 = vcmask 261120
        %v528 = vsel %vm526, %v499, 0
        %v531 = vsel %vm526, %v500, 0
        %v534 = vsel %vm526, %v501, 0
        %v537 = vsel %vm526, %v502, 0
        %v540 = vsel %vm526, %v503, 0
        %v543 = vsel %vm526, %v504, 0
        %v546 = vsel %vm526, %v505, 0
        %v549 = vsel %vm526, %v506, 0
        %v552 = vsel %vm526, %v507, 0
        %v555 = vsel %vm526, %v508, 0
        %v558 = vsel %vm526, %v509, 0
        %v561 = vsel %vm526, %v510, 0
        %v564 = vsel %vm526, %v511, 0
        %v567 = vsel %vm526, %v512, 0
        %v570 = vsel %vm526, %v513, 0
        %v573 = vsel %vm526, %v514, 0
        %575 = vmatprep.subr.mxu0 0.0
        %576 = vmatpush1.msra.mxu0 %v515
        %577 = vmatprep.subr.mxu0 0.0
        %578 = vmatpush1.msra.mxu0 %v516
        %579 = vmatprep.subr.mxu0 0.0
        %580 = vmatpush1.msra.mxu0 %v517
        %581 = vmatprep.subr.mxu0 0.0
        %582 = vmatpush1.msra.mxu0 %v518
        %583 = vmatprep.subr.mxu0 0.0
        %584 = vmatpush1.msra.mxu0 0.0
        %585 = vmatprep.subr.mxu0 0.0
        %586 = vmatpush1.msra.mxu0 0.0
        %587 = vmatprep.subr.mxu0 0.0
        %588 = vmatpush1.msra.mxu0 0.0
        %589 = vmatprep.subr.mxu0 0.0
        %590 = vmatpush1.msra.mxu0 0.0
        %591 = vmatprep.subr.mxu0 0.0
        %592 = vmatpush1.msra.mxu0 0.0
        %593 = vmatprep.subr.mxu0 0.0
        %594 = vmatpush1.msra.mxu0 0.0
        %595 = vmatprep.subr.mxu0 0.0
        %596 = vmatpush1.msra.mxu0 0.0
        %597 = vmatprep.subr.mxu0 0.0
        %598 = vmatpush1.msra.mxu0 0.0
        %599 = vmatprep.subr.mxu0 0.0
        %600 = vmatpush1.msra.mxu0 0.0
        %601 = vmatprep.subr.mxu0 0.0
        %602 = vmatpush1.msra.mxu0 0.0
        %603 = vmatprep.subr.mxu0 0.0
        %604 = vmatpush1.msra.mxu0 0.0
        %605 = vmatprep.subr.mxu0 0.0
        %606 = vmatpush1.msra.mxu0 0.0
        %607 = vmatprep.subr.mxu0 0.0
        %608 = vmatpush1.msra.mxu0 0.0
        %609 = vmatprep.subr.mxu0 0.0
        %610 = vmatpush1.msra.mxu0 0.0
        %611 = vmatprep.subr.mxu0 0.0
        %612 = vmatpush1.msra.mxu0 0.0
        %613 = vmatprep.subr.mxu0 0.0
        %614 = vmatpush1.msra.mxu0 0.0
        %615 = vmatprep.subr.mxu0 0.0
        %616 = vmatpush1.msra.mxu0 0.0
        %617 = vmatprep.subr.mxu0 0.0
        %618 = vmatpush1.msra.mxu0 0.0
        %619 = vmatprep.subr.mxu0 0.0
        %620 = vmatpush1.msra.mxu0 0.0
        %621 = vmatprep.subr.mxu0 0.0
        %622 = vmatpush1.msra.mxu0 0.0
        %623 = vmatprep.subr.mxu0 0.0
        %624 = vmatpush1.msra.mxu0 0.0
        %625 = vmatprep.subr.mxu0 0.0
        %626 = vmatpush1.msra.mxu0 0.0
        %627 = vmatprep.subr.mxu0 0.0
        %628 = vmatpush1.msra.mxu0 0.0
        %629 = vmatprep.subr.mxu0 0.0
        %630 = vmatpush1.msra.mxu0 0.0
        %631 = vmatprep.subr.mxu0 0.0
        %632 = vmatpush1.msra.mxu0 0.0
        %633 = vmatprep.subr.mxu0 0.0
        %634 = vmatpush1.msra.mxu0 0.0
        %635 = vmatprep.subr.mxu0 0.0
        %636 = vmatpush1.msra.mxu0 0.0
        %637 = vmatprep.subr.mxu0 0.0
        %638 = vmatpush1.msra.mxu0 0.0
        %639 = vmatprep.mubr.f32.mxu0 0.0
        %640 = vmatmul.mubr.f32.gmra.mrb[0].mxu0 %v528
        %v641 = vpop.f32.mrb[0].mxu0
        %v642 = vadd.f32 %v524, %v641
        %v643 = vpop.f32.mrb[0].mxu0
        %644 = vmatprep.mubr.f32.mxu0 0.0
        %645 = vmatmul.mubr.f32.gmra.mrb[0].mxu0 %v531
        %v646 = vpop.f32.mrb[0].mxu0
        %v647 = vadd.f32 %v524, %v646
        %v648 = vpop.f32.mrb[0].mxu0
        %649 = vmatprep.mubr.f32.mxu0 0.0
        %650 = vmatmul.mubr.f32.gmra.mrb[0].mxu0 %v534
        %v651 = vpop.f32.mrb[0].mxu0
        %v652 = vadd.f32 %v524, %v651
        %v653 = vpop.f32.mrb[0].mxu0
        %654 = vmatprep.mubr.f32.mxu0 0.0
        %655 = vmatmul.mubr.f32.gmra.mrb[0].mxu0 %v537
        %v656 = vpop.f32.mrb[0].mxu0
        %v657 = vadd.f32 %v524, %v656
        %v658 = vpop.f32.mrb[0].mxu0
        %659 = vmatprep.mubr.f32.mxu0 0.0
        %660 = vmatmul.mubr.f32.gmra.mrb[0].mxu0 %v540
        %v661 = vpop.f32.mrb[0].mxu0
        %v662 = vadd.f32 %v524, %v661
        %v663 = vpop.f32.mrb[0].mxu0
        %664 = vmatprep.mubr.f32.mxu0 0.0
        %665 = vmatmul.mubr.f32.gmra.mrb[0].mxu0 %v543
        %v666 = vpop.f32.mrb[0].mxu0
        %v667 = vadd.f32 %v524, %v666
        %v668 = vpop.f32.mrb[0].mxu0
        %669 = vmatprep.mubr.f32.mxu0 0.0
        %670 = vmatmul.mubr.f32.gmra.mrb[0].mxu0 %v546
        %v671 = vpop.f32.mrb[0].mxu0
        %v672 = vadd.f32 %v524, %v671
        %v673 = vpop.f32.mrb[0].mxu0
        %674 = vmatprep.mubr.f32.mxu0 0.0
        %675 = vmatmul.mubr.f32.gmra.mrb[0].mxu0 %v549
        %v676 = vpop.f32.mrb[0].mxu0
        %v677 = vadd.f32 %v524, %v676
        %v678 = vpop.f32.mrb[0].mxu0
        %679 = vmatprep.mubr.f32.mxu0 0.0
        %680 = vmatmul.mubr.f32.gmra.mrb[0].mxu0 %v552
        %v681 = vpop.f32.mrb[0].mxu0
        %v682 = vadd.f32 %v524, %v681
        %v683 = vpop.f32.mrb[0].mxu0
        %684 = vmatprep.mubr.f32.mxu0 0.0
        %685 = vmatmul.mubr.f32.gmra.mrb[0].mxu0 %v555
        %v686 = vpop.f32.mrb[0].mxu0
        %v687 = vadd.f32 %v524, %v686
        %v688 = vpop.f32.mrb[0].mxu0
        %689 = vmatprep.mubr.f32.mxu0 0.0
        %690 = vmatmul.mubr.f32.gmra.mrb[0].mxu0 %v558
        %v691 = vpop.f32.mrb[0].mxu0
        %v692 = vadd.f32 %v524, %v691
        %v693 = vpop.f32.mrb[0].mxu0
        %694 = vmatprep.mubr.f32.mxu0 0.0
        %695 = vmatmul.mubr.f32.gmra.mrb[0].mxu0 %v561
        %v696 = vpop.f32.mrb[0].mxu0
        %v697 = vadd.f32 %v524, %v696
        %v698 = vpop.f32.mrb[0].mxu0
        %699 = vmatprep.mubr.f32.mxu0 0.0
        %700 = vmatmul.mubr.f32.gmra.mrb[0].mxu0 %v564
        %v701 = vpop.f32.mrb[0].mxu0
        %v702 = vadd.f32 %v524, %v701
        %v703 = vpop.f32.mrb[0].mxu0
        %704 = vmatprep.mubr.f32.mxu0 0.0
        %705 = vmatmul.mubr.f32.gmra.mrb[0].mxu0 %v567
        %v706 = vpop.f32.mrb[0].mxu0
        %v707 = vadd.f32 %v524, %v706
        %v708 = vpop.f32.mrb[0].mxu0
        %709 = vmatprep.mubr.f32.mxu0 0.0
        %710 = vmatmul.mubr.f32.gmra.mrb[0].mxu0 %v570
        %v711 = vpop.f32.mrb[0].mxu0
        %v712 = vadd.f32 %v524, %v711
        %v713 = vpop.f32.mrb[0].mxu0
        %714 = vmatprep.mubr.f32.mxu0 0.0
        %715 = vmatmul.mubr.f32.gmra.mrb[0].mxu0 %v573
        %v716 = vpop.f32.mrb[0].mxu0
        %v717 = vadd.f32 %v524, %v716
        %v718 = vpop.f32.mrb[0].mxu0
        %719 = vdwg.mxu0
        %v720 = vmax.f32 %v642, 0.0
        %v721 = vmax.f32 %v647, 0.0
        %v722 = vmax.f32 %v652, 0.0
        %v723 = vmax.f32 %v657, 0.0
        %v724 = vmax.f32 %v662, 0.0
        %v725 = vmax.f32 %v667, 0.0
        %v726 = vmax.f32 %v672, 0.0
        %v727 = vmax.f32 %v677, 0.0
        %v728 = vmax.f32 %v682, 0.0
        %v729 = vmax.f32 %v687, 0.0
        %v730 = vmax.f32 %v692, 0.0
        %v731 = vmax.f32 %v697, 0.0
        %v732 = vmax.f32 %v702, 0.0
        %v733 = vmax.f32 %v707, 0.0
        %v734 = vmax.f32 %v712, 0.0
        %v735 = vmax.f32 %v717, 0.0
        %v736 = vld [vmem:[%s5] sm:$0xff]
        %v737 = vld [vmem:[%s5 + $0x8] sm:$0xff]
        %v738 = vld [vmem:[%s5 + $0x10] sm:$0xff]
        %v739 = vld [vmem:[%s5 + $0x18] sm:$0xff]
        %v740 = vld [vmem:[%s6] sm:$0x1]
        %v742 = vlaneseq
        %v743 = vshrl.u32 %v742, 7
        %v744 = vsub.s32 0, %v743
        %v745 = vrot.slane %v740, %v744
        %v748 = vsel %vm526, %v720, 0
        %v751 = vsel %vm526, %v721, 0
        %v754 = vsel %vm526, %v722, 0
        %v757 = vsel %vm526, %v723, 0
        %v760 = vsel %vm526, %v724, 0
        %v763 = vsel %vm526, %v725, 0
        %v766 = vsel %vm526, %v726, 0
        %v769 = vsel %vm526, %v727, 0
        %v772 = vsel %vm526, %v728, 0
        %v775 = vsel %vm526, %v729, 0
        %v778 = vsel %vm526, %v730, 0
        %v781 = vsel %vm526, %v731, 0
        %v784 = vsel %vm526, %v732, 0
        %v787 = vsel %vm526, %v733, 0
        %v790 = vsel %vm526, %v734, 0
        %v793 = vsel %vm526, %v735, 0
        %795 = vmatprep.subr.mxu0 0.0
        %796 = vmatpush1.msra.mxu0 %v736
        %797 = vmatprep.subr.mxu0 0.0
        %798 = vmatpush1.msra.mxu0 %v737
        %799 = vmatprep.subr.mxu0 0.0
        %800 = vmatpush1.msra.mxu0 %v738
        %801 = vmatprep.subr.mxu0 0.0
        %802 = vmatpush1.msra.mxu0 %v739
        %803 = vmatprep.subr.mxu0 0.0
        %804 = vmatpush1.msra.mxu0 0.0
        %805 = vmatprep.subr.mxu0 0.0
        %806 = vmatpush1.msra.mxu0 0.0
        %807 = vmatprep.subr.mxu0 0.0
        %808 = vmatpush1.msra.mxu0 0.0
        %809 = vmatprep.subr.mxu0 0.0
        %810 = vmatpush1.msra.mxu0 0.0
        %811 = vmatprep.subr.mxu0 0.0
        %812 = vmatpush1.msra.mxu0 0.0
        %813 = vmatprep.subr.mxu0 0.0
        %814 = vmatpush1.msra.mxu0 0.0
        %815 = vmatprep.subr.mxu0 0.0
        %816 = vmatpush1.msra.mxu0 0.0
        %817 = vmatprep.subr.mxu0 0.0
        %818 = vmatpush1.msra.mxu0 0.0
        %819 = vmatprep.subr.mxu0 0.0
        %820 = vmatpush1.msra.mxu0 0.0
        %821 = vmatprep.subr.mxu0 0.0
        %822 = vmatpush1.msra.mxu0 0.0
        %823 = vmatprep.subr.mxu0 0.0
        %824 = vmatpush1.msra.mxu0 0.0
        %825 = vmatprep.subr.mxu0 0.0
        %826 = vmatpush1.msra.mxu0 0.0
        %827 = vmatprep.subr.mxu0 0.0
        %828 = vmatpush1.msra.mxu0 0.0
        %829 = vmatprep.subr.mxu0 0.0
        %830 = vmatpush1.msra.mxu0 0.0
        %831 = vmatprep.subr.mxu0 0.0
        %832 = vmatpush1.msra.mxu0 0.0
        %833 = vmatprep.subr.mxu0 0.0
        %834 = vmatpush1.msra.mxu0 0.0
        %835 = vmatprep.subr.mxu0 0.0
        %836 = vmatpush1.msra.mxu0 0.0
        %837 = vmatprep.subr.mxu0 0.0
        %838 = vmatpush1.msra.mxu0 0.0
        %839 = vmatprep.subr.mxu0 0.0
        %840 = vmatpush1.msra.mxu0 0.0
        %841 = vmatprep.subr.mxu0 0.0
        %842 = vmatpush1.msra.mxu0 0.0
        %843 = vmatprep.subr.mxu0 0.0
        %844 = vmatpush1.msra.mxu0 0.0
        %845 = vmatprep.subr.mxu0 0.0
        %846 = vmatpush1.msra.mxu0 0.0
        %847 = vmatprep.subr.mxu0 0.0
        %848 = vmatpush1.msra.mxu0 0.0
        %849 = vmatprep.subr.mxu0 0.0
        %850 = vmatpush1.msra.mxu0 0.0
        %851 = vmatprep.subr.mxu0 0.0
        %852 = vmatpush1.msra.mxu0 0.0
        %853 = vmatprep.subr.mxu0 0.0
        %854 = vmatpush1.msra.mxu0 0.0
        %855 = vmatprep.subr.mxu0 0.0
        %856 = vmatpush1.msra.mxu0 0.0
        %857 = vmatprep.subr.mxu0 0.0
        %858 = vmatpush1.msra.mxu0 0.0
        %859 = vmatprep.mubr.f32.mxu0 0.0
        %860 = vmatmul.mubr.f32.gmra.mrb[0].mxu0 %v748
        %v861 = vpop.f32.mrb[0].mxu0
        %v862 = vadd.f32 %v745, %v861
        %v863 = vpop.f32.mrb[0].mxu0
        %864 = vmatprep.mubr.f32.mxu0 0.0
        %865 = vmatmul.mubr.f32.gmra.mrb[0].mxu0 %v751
        %v866 = vpop.f32.mrb[0].mxu0
        %v867 = vadd.f32 %v745, %v866
        %v868 = vpop.f32.mrb[0].mxu0
        %869 = vmatprep.mubr.f32.mxu0 0.0
        %870 = vmatmul.mubr.f32.gmra.mrb[0].mxu0 %v754
        %v871 = vpop.f32.mrb[0].mxu0
        %v872 = vadd.f32 %v745, %v871
        %v873 = vpop.f32.mrb[0].mxu0
        %874 = vmatprep.mubr.f32.mxu0 0.0
        %875 = vmatmul.mubr.f32.gmra.mrb[0].mxu0 %v757
        %v876 = vpop.f32.mrb[0].mxu0
        %v877 = vadd.f32 %v745, %v876
        %v878 = vpop.f32.mrb[0].mxu0
        %879 = vmatprep.mubr.f32.mxu0 0.0
        %880 = vmatmul.mubr.f32.gmra.mrb[0].mxu0 %v760
        %v881 = vpop.f32.mrb[0].mxu0
        %v882 = vadd.f32 %v745, %v881
        %v883 = vpop.f32.mrb[0].mxu0
        %884 = vmatprep.mubr.f32.mxu0 0.0
        %885 = vmatmul.mubr.f32.gmra.mrb[0].mxu0 %v763
        %v886 = vpop.f32.mrb[0].mxu0
        %v887 = vadd.f32 %v745, %v886
        %v888 = vpop.f32.mrb[0].mxu0
        %889 = vmatprep.mubr.f32.mxu0 0.0
        %890 = vmatmul.mubr.f32.gmra.mrb[0].mxu0 %v766
        %v891 = vpop.f32.mrb[0].mxu0
        %v892 = vadd.f32 %v745, %v891
        %v893 = vpop.f32.mrb[0].mxu0
        %894 = vmatprep.mubr.f32.mxu0 0.0
        %895 = vmatmul.mubr.f32.gmra.mrb[0].mxu0 %v769
        %v896 = vpop.f32.mrb[0].mxu0
        %v897 = vadd.f32 %v745, %v896
        %v898 = vpop.f32.mrb[0].mxu0
        %899 = vmatprep.mubr.f32.mxu0 0.0
        %900 = vmatmul.mubr.f32.gmra.mrb[0].mxu0 %v772
        %v901 = vpop.f32.mrb[0].mxu0
        %v902 = vadd.f32 %v745, %v901
        %v903 = vpop.f32.mrb[0].mxu0
        %904 = vmatprep.mubr.f32.mxu0 0.0
        %905 = vmatmul.mubr.f32.gmra.mrb[0].mxu0 %v775
        %v906 = vpop.f32.mrb[0].mxu0
        %v907 = vadd.f32 %v745, %v906
        %v908 = vpop.f32.mrb[0].mxu0
        %909 = vmatprep.mubr.f32.mxu0 0.0
        %910 = vmatmul.mubr.f32.gmra.mrb[0].mxu0 %v778
        %v911 = vpop.f32.mrb[0].mxu0
        %v912 = vadd.f32 %v745, %v911
        %v913 = vpop.f32.mrb[0].mxu0
        %914 = vmatprep.mubr.f32.mxu0 0.0
        %915 = vmatmul.mubr.f32.gmra.mrb[0].mxu0 %v781
        %v916 = vpop.f32.mrb[0].mxu0
        %v917 = vadd.f32 %v745, %v916
        %v918 = vpop.f32.mrb[0].mxu0
        %919 = vmatprep.mubr.f32.mxu0 0.0
        %920 = vmatmul.mubr.f32.gmra.mrb[0].mxu0 %v784
        %v921 = vpop.f32.mrb[0].mxu0
        %v922 = vadd.f32 %v745, %v921
        %v923 = vpop.f32.mrb[0].mxu0
        %924 = vmatprep.mubr.f32.mxu0 0.0
        %925 = vmatmul.mubr.f32.gmra.mrb[0].mxu0 %v787
        %v926 = vpop.f32.mrb[0].mxu0
        %v927 = vadd.f32 %v745, %v926
        %v928 = vpop.f32.mrb[0].mxu0
        %929 = vmatprep.mubr.f32.mxu0 0.0
        %930 = vmatmul.mubr.f32.gmra.mrb[0].mxu0 %v790
        %v931 = vpop.f32.mrb[0].mxu0
        %v932 = vadd.f32 %v745, %v931
        %v933 = vpop.f32.mrb[0].mxu0
        %934 = vmatprep.mubr.f32.mxu0 0.0
        %935 = vmatmul.mubr.f32.gmra.mrb[0].mxu0 %v793
        %v936 = vpop.f32.mrb[0].mxu0
        %v937 = vadd.f32 %v745, %v936
        %v938 = vpop.f32.mrb[0].mxu0
        %939 = vdwg.mxu0
        %940 = vst [vmem:[%s272] sm:$0xff] %v862
        %941 = vst [vmem:[%s272 + $0x8] sm:$0xff] %v867
        %942 = vst [vmem:[%s272 + $0x10] sm:$0xff] %v872
        %943 = vst [vmem:[%s272 + $0x18] sm:$0xff] %v877
        %944 = vst [vmem:[%s272 + $0x20] sm:$0xff] %v882
        %945 = vst [vmem:[%s272 + $0x28] sm:$0xff] %v887
        %946 = vst [vmem:[%s272 + $0x30] sm:$0xff] %v892
        %947 = vst [vmem:[%s272 + $0x38] sm:$0xff] %v897
        %948 = vst [vmem:[%s272 + $0x40] sm:$0xff] %v902
        %949 = vst [vmem:[%s272 + $0x48] sm:$0xff] %v907
        %950 = vst [vmem:[%s272 + $0x50] sm:$0xff] %v912
        %951 = vst [vmem:[%s272 + $0x58] sm:$0xff] %v917
        %952 = vst [vmem:[%s272 + $0x60] sm:$0xff] %v922
        %953 = vst [vmem:[%s272 + $0x68] sm:$0xff] %v927
        %954 = vst [vmem:[%s272 + $0x70] sm:$0xff] %v932
        %955 = vst [vmem:[%s272 + $0x78] sm:$0xff] %v937
        %s956 = sand.u32 %s181, 1
        %s957 = scalar_lea.sflag [#allocation3], %s956
        %s958 = sand.u32 %s181, 1
        %s959 = smul.addr %s958, 128
        %s960 = scalar_lea.vmem [#allocation2], %s959
        // Predicated region
        $region49: #{tpu_custom_call.1} parent=47 // pred_check
          %p961 = pneg %p191
        $region50: #{tpu_custom_call.1} parent=47 // pred_check_branch
          %963 = sbr.rel (%p961) target = $region52
        $region51: #{tpu_custom_call.1} parent=47 // pred_region
          %s964 = smul.u32 16, %s21
          %s966 = ssub.s32 2048, 2048
          %967 = vsyncadd %s957, %s966
          %s968 = smul.addr %s964, 128
          %s969 = scalar_lea.hbm %s7, %s968
          %s970 = sshll.u32 %s960, 4
          %s971 = int_to_ptr.vmem [resolvable:$true] %s970
          %976 = dma.vmem_to_hbm [thread:$0]  %s971, 2048, %s969, %s957, 128, 128, 8
        $region52: #{tpu_custom_call.1} parent=47 // pred_fallthru
          _
      $region48: #{tpu_custom_call.1} parent=5 // pred_fallthru
        _
      %p977 = scmp.le.s32.totalorder 2, %s16
      // Predicated region
      $region53: #{tpu_custom_call.1} parent=5 // pred_check
        %p978 = pneg %p977
      $region54: #{tpu_custom_call.1} parent=5 // pred_check_branch
        %980 = sbr.rel (%p978) target = $region56
      $region55: #{tpu_custom_call.1} parent=5 // pred_region
        %s981 = ssub.s32 %s16, 2
        // Predicated region
        $region57: #{tpu_custom_call.1} parent=55 // pred_check
          %p982 = pneg %p197
        $region58: #{tpu_custom_call.1} parent=55 // pred_check_branch
          %984 = sbr.rel (%p982) target = $region60
        $region59: #{tpu_custom_call.1} parent=55 // pred_region
          %s985 = sand.u32 %s182, 1
          %s986 = scalar_lea.sflag [#allocation3], %s985
          %s987 = sand.u32 %s182, 1
          %s988 = smul.addr %s987, 128
          %s989 = scalar_lea.vmem [#allocation2], %s988
          %990 = dma.done %s986, 2048
        $region60: #{tpu_custom_call.1} parent=55 // pred_fallthru
          _
      $region56: #{tpu_custom_call.1} parent=5 // pred_fallthru
        _
    $region6: #{tpu_custom_call.1} parent=1 // loop_footer
      %s20 = sadd.s32 1, %s16
    $region7: #{tpu_custom_call.1} parent=1 // loop_footer_branch
      %15 = sbr.rel target = $region3
    $region8: #{tpu_custom_call.1} parent=1 // loop_exit
      _
    %991 = vsyncpa [#allocation3], 1
    %s992 = scalar_lea.sflag [#allocation3], 1
    %993 = vsyncpa %s992, 1

</llo_original>
